<compile_context>
chip_gen: v7x
topology: tpu7x:2x2x1
jax: 0.10.0
libtpu: 0.0.40
codegen_flags: <defaults>
</compile_context>

<pallas_src>
import jax
import jax.numpy as jnp
from jax.experimental import pallas as pl
from jax.experimental.pallas import tpu as pltpu


def basic_nn_kernel(x_ref, w1_ref, b1_ref, w2_ref, b2_ref, o_ref):
    # x_ref: (TB, S, F) bf16 tile in VMEM; one cheap upcast per tile.
    x = x_ref[...].astype(jnp.float32)

    # AvgPool1d over the full sequence (== transpose + AvgPool1d(S) + view in torch)
    pooled = jnp.mean(x, axis=1)                                       # (TB, F)

    # linear -> tanh (f32 MXU accumulation)
    h = jnp.tanh(
        jnp.dot(pooled, w1_ref[...], preferred_element_type=jnp.float32)
        + b1_ref[...]
    )                                                                  # (TB, H)

    # Dropout(p=0.1): identity in inference/eval mode.
    # TODO(synk): training-mode dropout (pltpu.prng_random_bits mask) not emitted.

    # linear2 against lane-padded (H, C_PAD) weights; padded columns carry a
    # -1e30 bias so exp(logit - max) is exactly 0 for them.
    logits = (
        jnp.dot(h, w2_ref[...], preferred_element_type=jnp.float32)
        + b2_ref[...]
    )                                                                  # (TB, C_PAD)

    # Numerically stable softmax over the class dim; divide on the EUP.
    m = jnp.max(logits, axis=-1, keepdims=True)
    e = jnp.exp(logits - m)
    denom = jnp.sum(e, axis=-1, keepdims=True)
    o_ref[...] = (e * pl.reciprocal(denom, approx=True)).astype(o_ref.dtype)


def basic_nn_forward(x, w1, b1, w2, b2, *, block_batch=512, lane_pad=128):
    """x: (B, S, F) f32; w1: (F, H); b1: (1, H); w2: (H, C); b2: (1, C)."""
    B, S, F = x.shape
    H = w1.shape[1]
    nclass = w2.shape[1]

    # bf16 input: halves the dominant HBM->VMEM bytes (kernel is memory-bound).
    x_bf16 = x.astype(jnp.bfloat16)

    # Lane-dense class dim: pad W2 with zero columns and b2 with a huge negative
    # bias so padded classes get softmax weight exactly 0; slice outside.
    c_pad = max(lane_pad, nclass)
    w2_p = jnp.zeros((H, c_pad), w2.dtype).at[:, :nclass].set(w2)
    b2_p = jnp.full((1, c_pad), -1e30, b2.dtype).at[:, :nclass].set(b2)

    # Batch tile: keep modest so 2x buffered (TB,S,F) bf16 + f32 intermediates
    # fit comfortably inside the scoped VMEM default on all of v5e/v6e/v7x.
    tb = min(block_batch, B)
    grid = (pl.cdiv(B, tb),)

    out = pl.pallas_call(
        basic_nn_kernel,
        out_shape=jax.ShapeDtypeStruct((B, c_pad), jnp.float32),
        grid_spec=pltpu.PrefetchScalarGridSpec(
            num_scalar_prefetch=0,
            grid=grid,
            in_specs=[
                pl.BlockSpec((tb, S, F), lambda i: (i, 0, 0)),   # x tile (pipelined)
                pl.BlockSpec((F, H), lambda i: (0, 0)),          # W1 (resident)
                pl.BlockSpec((1, H), lambda i: (0, 0)),          # b1
                pl.BlockSpec((H, c_pad), lambda i: (0, 0)),      # W2 (padded)
                pl.BlockSpec((1, c_pad), lambda i: (0, 0)),      # b2 (padded)
            ],
            out_specs=pl.BlockSpec((tb, c_pad), lambda i: (i, 0)),
        ),
        compiler_params=pltpu.CompilerParams(
            dimension_semantics=("parallel",),
        ),
    )(x_bf16, w1, b1, w2_p, b2_p)

    return out[:, :nclass]


if __name__ == "__main__":
    # Small shapes consistent with the module; batch chosen so the grid has
    # more than one step (exercises the pipelined batch tiling).
    batch = 64
    title_len, body_len = 4, 4          # seq = 8
    inputn = 32                         # feature dim
    nhidden = 32
    nclass = 8
    seq = title_len + body_len

    key = jax.random.PRNGKey(0)
    kx, kw1, kb1, kw2, kb2 = jax.random.split(key, 5)

    x = jax.random.normal(kx, (batch, seq, inputn), dtype=jnp.float32)

    # Deterministic parameter init (stored transposed vs. torch: (in, out))
    w1 = jax.random.normal(kw1, (inputn, nhidden), dtype=jnp.float32) * 0.1
    b1 = jax.random.normal(kb1, (1, nhidden), dtype=jnp.float32) * 0.1
    w2 = jax.random.normal(kw2, (nhidden, nclass), dtype=jnp.float32) * 0.1
    b2 = jax.random.normal(kb2, (1, nclass), dtype=jnp.float32) * 0.1

    out = basic_nn_forward(x, w1, b1, w2, b2, block_batch=32)   # grid = (2,)
    out = jax.block_until_ready(out)

    # Pure-JAX reference (same bf16 input cast as the kernel; dropout=identity).
    x_cast = x.astype(jnp.bfloat16).astype(jnp.float32)
    pooled = jnp.mean(x_cast, axis=1)
    h = jnp.tanh(pooled @ w1 + b1)
    ref = jax.nn.softmax(h @ w2 + b2, axis=-1)

    assert out.shape == (batch, nclass)
    assert jnp.allclose(out, ref, atol=5e-3), "mismatch vs reference"
    assert jnp.allclose(jnp.sum(out, axis=-1), 1.0, atol=5e-3), "softmax rows must sum to 1"

    print("KERNEL_OK")
</pallas_src>

<mosaic_0001>
module attributes {stable_mosaic.version = 11 : i64} {
  func.func @basic_nn_kernel(%arg0: i32, %arg1: memref<32x8x32xbf16, #tpu.memory_space<vmem>>, %arg2: memref<32x32xf32, #tpu.memory_space<vmem>>, %arg3: memref<1x32xf32, #tpu.memory_space<vmem>>, %arg4: memref<32x128xf32, #tpu.memory_space<vmem>>, %arg5: memref<1x128xf32, #tpu.memory_space<vmem>>, %arg6: memref<32x128xf32, #tpu.memory_space<vmem>>) attributes {dimension_semantics = [#tpu.dimension_semantics<parallel>], iteration_bounds = array<i64: 2>, scalar_prefetch = 0 : i64, scratch_operands = 0 : i64, tpu.core_type = #tpu.core_type<tc>, window_params = [{transform_indices = @transform_0, window_bounds = array<i64: 32, 8, 32>}, {pipeline_mode = #tpu.pipeline_mode<synchronous>, transform_indices = @transform_1, window_bounds = array<i64: 32, 32>}, {pipeline_mode = #tpu.pipeline_mode<synchronous>, transform_indices = @transform_2, window_bounds = array<i64: 1, 32>}, {pipeline_mode = #tpu.pipeline_mode<synchronous>, transform_indices = @transform_3, window_bounds = array<i64: 32, 128>}, {pipeline_mode = #tpu.pipeline_mode<synchronous>, transform_indices = @transform_4, window_bounds = array<i64: 1, 128>}, {transform_indices = @transform_5, window_bounds = array<i64: 32, 128>}]} {
    %c0 = arith.constant 0 : index
    %c0_0 = arith.constant 0 : index
    %c0_1 = arith.constant 0 : index
    %0 = vector.load %arg1[%c0, %c0_0, %c0_1] : memref<32x8x32xbf16, #tpu.memory_space<vmem>>, vector<32x8x32xbf16>
    %1 = arith.extf %0 : vector<32x8x32xbf16> to vector<32x8x32xf32>
    %cst = arith.constant dense<0.000000e+00> : vector<32x32xf32>
    %2 = vector.multi_reduction <add>, %1, %cst [1] : vector<32x8x32xf32> to vector<32x32xf32>
    %cst_2 = arith.constant 8.000000e+00 : f32
    %3 = vector.broadcast %cst_2 : f32 to vector<32x32xf32>
    %4 = arith.divf %2, %3 : vector<32x32xf32>
    %c0_3 = arith.constant 0 : index
    %c0_4 = arith.constant 0 : index
    %5 = vector.load %arg2[%c0_3, %c0_4] : memref<32x32xf32, #tpu.memory_space<vmem>>, vector<32x32xf32>
    %cst_5 = arith.constant dense<0.000000e+00> : vector<32x32xf32>
    %6 = tpu.matmul %4, %5, %cst_5 {dimension_numbers = #tpu.dot_dimension_numbers<[1], [0], [0], [1], [0, 0, 1, 1], [], []>} : vector<32x32xf32>, vector<32x32xf32>, vector<32x32xf32> -> vector<32x32xf32>
    %c0_6 = arith.constant 0 : index
    %c0_7 = arith.constant 0 : index
    %7 = vector.load %arg3[%c0_6, %c0_7] : memref<1x32xf32, #tpu.memory_space<vmem>>, vector<1x32xf32>
    %8 = vector.broadcast %7 : vector<1x32xf32> to vector<32x32xf32>
    %9 = arith.addf %6, %8 : vector<32x32xf32>
    %10 = math.tanh %9 : vector<32x32xf32>
    %c0_8 = arith.constant 0 : index
    %c0_9 = arith.constant 0 : index
    %11 = vector.load %arg4[%c0_8, %c0_9] : memref<32x128xf32, #tpu.memory_space<vmem>>, vector<32x128xf32>
    %cst_10 = arith.constant dense<0.000000e+00> : vector<32x128xf32>
    %12 = tpu.matmul %10, %11, %cst_10 {dimension_numbers = #tpu.dot_dimension_numbers<[1], [0], [0], [1], [0, 0, 1, 1], [], []>} : vector<32x32xf32>, vector<32x128xf32>, vector<32x128xf32> -> vector<32x128xf32>
    %c0_11 = arith.constant 0 : index
    %c0_12 = arith.constant 0 : index
    %13 = vector.load %arg5[%c0_11, %c0_12] : memref<1x128xf32, #tpu.memory_space<vmem>>, vector<1x128xf32>
    %14 = vector.broadcast %13 : vector<1x128xf32> to vector<32x128xf32>
    %15 = arith.addf %12, %14 : vector<32x128xf32>
    %cst_13 = arith.constant dense<0xFF800000> : vector<32xf32>
    %16 = vector.multi_reduction <maximumf>, %15, %cst_13 [1] : vector<32x128xf32> to vector<32xf32>
    %17 = vector.shape_cast %16 : vector<32xf32> to vector<32x1xf32>
    %18 = vector.broadcast %17 : vector<32x1xf32> to vector<32x128xf32>
    %19 = arith.subf %15, %18 : vector<32x128xf32>
    %20 = math.exp %19 : vector<32x128xf32>
    %cst_14 = arith.constant dense<0.000000e+00> : vector<32xf32>
    %21 = vector.multi_reduction <add>, %20, %cst_14 [1] : vector<32x128xf32> to vector<32xf32>
    %22 = vector.shape_cast %21 : vector<32xf32> to vector<32x1xf32>
    %23 = tpu.reciprocal %22 {approx = true} : vector<32x1xf32> -> vector<32x1xf32>
    %24 = vector.broadcast %23 : vector<32x1xf32> to vector<32x128xf32>
    %25 = arith.mulf %20, %24 : vector<32x128xf32>
    %c0_15 = arith.constant 0 : index
    %c0_16 = arith.constant 0 : index
    %26 = vector.load %arg6[%c0_15, %c0_16] : memref<32x128xf32, #tpu.memory_space<vmem>>, vector<32x128xf32>
    tpu.vector_store %arg6[%c0_15, %c0_16], %25 {strides = array<i32>} : memref<32x128xf32, #tpu.memory_space<vmem>>, vector<32x128xf32>,
    return
  }
  func.func @transform_0(%arg0: i32) -> (i32, i32, i32) {
    %c0_i32 = arith.constant 0 : i32
    %c0_i32_0 = arith.constant 0 : i32
    %c0_i32_1 = arith.constant 0 : i32
    return %arg0, %c0_i32, %c0_i32_0 : i32, i32, i32
  }
  func.func @transform_1(%arg0: i32) -> (i32, i32) {
    %c0_i32 = arith.constant 0 : i32
    %c0_i32_0 = arith.constant 0 : i32
    %c0_i32_1 = arith.constant 0 : i32
    return %c0_i32, %c0_i32_0 : i32, i32
  }
  func.func @transform_2(%arg0: i32) -> (i32, i32) {
    %c0_i32 = arith.constant 0 : i32
    %c0_i32_0 = arith.constant 0 : i32
    %c0_i32_1 = arith.constant 0 : i32
    return %c0_i32, %c0_i32_0 : i32, i32
  }
  func.func @transform_3(%arg0: i32) -> (i32, i32) {
    %c0_i32 = arith.constant 0 : i32
    %c0_i32_0 = arith.constant 0 : i32
    %c0_i32_1 = arith.constant 0 : i32
    return %c0_i32, %c0_i32_0 : i32, i32
  }
  func.func @transform_4(%arg0: i32) -> (i32, i32) {
    %c0_i32 = arith.constant 0 : i32
    %c0_i32_0 = arith.constant 0 : i32
    %c0_i32_1 = arith.constant 0 : i32
    return %c0_i32, %c0_i32_0 : i32, i32
  }
  func.func @transform_5(%arg0: i32) -> (i32, i32) {
    %c0_i32 = arith.constant 0 : i32
    %c0_i32_0 = arith.constant 0 : i32
    return %arg0, %c0_i32 : i32, i32
  }
}

</mosaic_0001>

<llo_original>
// kernel: tpu_custom_call.1
$region0: #{tpu_custom_call.1}
  #allocation0 [shape = 'u32[]', space=smem, size = 0x4, offset = 0x4, fixed_abs, tag = 'smem constant byte address 0x4 - core index']
  #allocation1 [shape = 'u32[144,128]{1,0:T(1,128)}', space=vmem, size = 0x12000, scoped, tag = 'internal scratch']
  %s0 = inlined_call_operand.vmem [shape: bf16[64,8,32], index: 0, kind: input, shape index: {}]
  %s1 = inlined_call_operand.vmem [shape: f32[32,32], index: 1, kind: input, shape index: {}]
  %s2 = inlined_call_operand.vmem [shape: f32[1,32], index: 2, kind: input, shape index: {}]
  %s3 = inlined_call_operand.vmem [shape: f32[32,128], index: 3, kind: input, shape index: {}]
  %s4 = inlined_call_operand.vmem [shape: f32[1,128], index: 4, kind: input, shape index: {}]
  %s5 = inlined_call_operand.hbm [shape: f32[64,128], index: 5, kind: output, shape index: {}]
  %s6 = sld [smem:[#allocation0]]
  $region53: #{tpu_custom_call.1} parent=0
    _
  %s8 = ssub.s32 1, %s6
  %s9 = scalar_select 0, %s8, %s6
  $region1: #{tpu_custom_call.1} parent=0
    #allocation2 [shape = 'u8[32768]{0}', space=vmem, size = 0x8000, scoped, tag = 'output window, operand 0']
    #allocation3 [shape = 's32[2]{0}', space=sflag, size = 0x8, scoped, tag = 'scoped memory for tpu_custom_call.1']
    %10 = vsyncpa [#allocation3], 0
    %s11 = scalar_lea.sflag [#allocation3], 1
    %12 = vsyncpa %s11, 0
    loop: start=0, step=1, limit=4
    $region2: #{tpu_custom_call.1} parent=1 // loop_pre_header
      _
    $region3: #{tpu_custom_call.1} parent=1 // loop_header
      %s14 = sphi 0, %s18
      %p15 = scmp.ge.s32.totalorder %s14, 4
      %s24 = sphi 0, %s26
      %s27 = sphi 0, %s24
      %s28 = sphi 0, %s27
      %s44 = sphi 0, %s28
      %s48 = sphi 0, %s48
      %s50 = sphi 0, %s48
      %s51 = sphi 0, %s50
      %s65 = sphi 0, %s51
      %s69 = sphi 0, %s69
      %s71 = sphi 0, %s69
      %s72 = sphi 0, %s71
      %s86 = sphi 0, %s72
      %s90 = sphi 0, %s90
      %s92 = sphi 0, %s90
      %s93 = sphi 0, %s92
      %s107 = sphi 0, %s93
      %s111 = sphi 0, %s111
      %s113 = sphi 0, %s111
      %s114 = sphi 0, %s113
      %s128 = sphi 0, %s114
      %s134 = sphi 0, %s136
      %s137 = sphi 0, %s134
      %s138 = sphi 0, %s137
      %s154 = sphi 0, %s138
    $region4: #{tpu_custom_call.1} parent=1 // loop_header_branch
      %17 = sbr.rel (%p15) target = $region8
    $region5: #{tpu_custom_call.1} parent=1 // loop_body
      %s19 = ssub.s32 %s14, 1
      %s20 = ssub.s32 %s14, 2
      %s21 = sadd.s32 %s14, 1
      %s22 = ssub.s32 %s14, %s21
      %p23 = scmp.eq.s32.totalorder %s22, 0
      %s25 = sadd.s32 %s24, 1
      %s26 = scalar_select %p23, %s24, %s25
      %p29 = pneg %p23
      %p30 = scmp.eq.s32.totalorder %s14, 1
      %p31 = por %p29, %p30
      %p32 = scmp.ne.s32.totalorder %s24, %s27
      %p33 = scmp.eq.s32.totalorder %s14, 0
      %p34 = por %p32, %p33
      %p35 = scmp.ne.s32.totalorder %s24, %s27
      %p36 = scmp.eq.s32.totalorder %s19, 1
      %p37 = por %p35, %p36
      %p38 = scmp.ne.s32.totalorder %s27, %s28
      %p39 = scmp.eq.s32.totalorder %s19, 0
      %p40 = por %p38, %p39
      %p41 = scmp.ne.s32.totalorder %s27, %s28
      %p42 = scmp.eq.s32.totalorder %s20, 1
      %p43 = por %p41, %p42
      %p45 = scmp.ne.s32.totalorder %s28, %s44
      %p46 = scmp.eq.s32.totalorder %s20, 0
      %p47 = por %p45, %p46
      %s49 = sadd.s32 %s48, 1
      %p52 = scmp.eq.s32.totalorder %s14, 1
      %p53 = scmp.ne.s32.totalorder %s48, %s50
      %p54 = scmp.eq.s32.totalorder %s14, 0
      %p55 = por %p53, %p54
      %p56 = scmp.ne.s32.totalorder %s48, %s50
      %p57 = scmp.eq.s32.totalorder %s19, 1
      %p58 = por %p56, %p57
      %p59 = scmp.ne.s32.totalorder %s50, %s51
      %p60 = scmp.eq.s32.totalorder %s19, 0
      %p61 = por %p59, %p60
      %p62 = scmp.ne.s32.totalorder %s50, %s51
      %p63 = scmp.eq.s32.totalorder %s20, 1
      %p64 = por %p62, %p63
      %p66 = scmp.ne.s32.totalorder %s51, %s65
      %p67 = scmp.eq.s32.totalorder %s20, 0
      %p68 = por %p66, %p67
      %s70 = sadd.s32 %s69, 1
      %p73 = scmp.eq.s32.totalorder %s14, 1
      %p74 = scmp.ne.s32.totalorder %s69, %s71
      %p75 = scmp.eq.s32.totalorder %s14, 0
      %p76 = por %p74, %p75
      %p77 = scmp.ne.s32.totalorder %s69, %s71
      %p78 = scmp.eq.s32.totalorder %s19, 1
      %p79 = por %p77, %p78
      %p80 = scmp.ne.s32.totalorder %s71, %s72
      %p81 = scmp.eq.s32.totalorder %s19, 0
      %p82 = por %p80, %p81
      %p83 = scmp.ne.s32.totalorder %s71, %s72
      %p84 = scmp.eq.s32.totalorder %s20, 1
      %p85 = por %p83, %p84
      %p87 = scmp.ne.s32.totalorder %s72, %s86
      %p88 = scmp.eq.s32.totalorder %s20, 0
      %p89 = por %p87, %p88
      %s91 = sadd.s32 %s90, 1
      %p94 = scmp.eq.s32.totalorder %s14, 1
      %p95 = scmp.ne.s32.totalorder %s90, %s92
      %p96 = scmp.eq.s32.totalorder %s14, 0
      %p97 = por %p95, %p96
      %p98 = scmp.ne.s32.totalorder %s90, %s92
      %p99 = scmp.eq.s32.totalorder %s19, 1
      %p100 = por %p98, %p99
      %p101 = scmp.ne.s32.totalorder %s92, %s93
      %p102 = scmp.eq.s32.totalorder %s19, 0
      %p103 = por %p101, %p102
      %p104 = scmp.ne.s32.totalorder %s92, %s93
      %p105 = scmp.eq.s32.totalorder %s20, 1
      %p106 = por %p104, %p105
      %p108 = scmp.ne.s32.totalorder %s93, %s107
      %p109 = scmp.eq.s32.totalorder %s20, 0
      %p110 = por %p108, %p109
      %s112 = sadd.s32 %s111, 1
      %p115 = scmp.eq.s32.totalorder %s14, 1
      %p116 = scmp.ne.s32.totalorder %s111, %s113
      %p117 = scmp.eq.s32.totalorder %s14, 0
      %p118 = por %p116, %p117
      %p119 = scmp.ne.s32.totalorder %s111, %s113
      %p120 = scmp.eq.s32.totalorder %s19, 1
      %p121 = por %p119, %p120
      %p122 = scmp.ne.s32.totalorder %s113, %s114
      %p123 = scmp.eq.s32.totalorder %s19, 0
      %p124 = por %p122, %p123
      %p125 = scmp.ne.s32.totalorder %s113, %s114
      %p126 = scmp.eq.s32.totalorder %s20, 1
      %p127 = por %p125, %p126
      %p129 = scmp.ne.s32.totalorder %s114, %s128
      %p130 = scmp.eq.s32.totalorder %s20, 0
      %p131 = por %p129, %p130
      %s132 = ssub.s32 %s14, %s21
      %p133 = scmp.eq.s32.totalorder %s132, 0
      %s135 = sadd.s32 %s134, 1
      %s136 = scalar_select %p133, %s134, %s135
      %p139 = pneg %p133
      %p140 = scmp.eq.s32.totalorder %s14, 1
      %p141 = por %p139, %p140
      %p142 = scmp.ne.s32.totalorder %s134, %s137
      %p143 = scmp.eq.s32.totalorder %s14, 0
      %p144 = por %p142, %p143
      %p145 = scmp.ne.s32.totalorder %s134, %s137
      %p146 = scmp.eq.s32.totalorder %s19, 1
      %p147 = por %p145, %p146
      %p148 = scmp.ne.s32.totalorder %s137, %s138
      %p149 = scmp.eq.s32.totalorder %s19, 0
      %p150 = por %p148, %p149
      %p151 = scmp.ne.s32.totalorder %s137, %s138
      %p152 = scmp.eq.s32.totalorder %s20, 1
      %p153 = por %p151, %p152
      %p155 = scmp.ne.s32.totalorder %s138, %s154
      %p156 = scmp.eq.s32.totalorder %s20, 0
      %p157 = por %p155, %p156
      %p158 = scmp.le.s32.totalorder 1, %s14
      %p159 = scmp.lt.s32.totalorder %s14, 3
      %p160 = pnand %p158, %p159
      %p161 = pneg %p160
      // Predicated region
      $region9: #{tpu_custom_call.1} parent=5 // pred_check
        _
      $region10: #{tpu_custom_call.1} parent=5 // pred_check_branch
        %163 = sbr.rel (%p160) target = $region12
      $region11: #{tpu_custom_call.1} parent=5 // pred_region
        %s164 = ssub.s32 %s14, 1
        // Predicated region
        $region13: #{tpu_custom_call.1} parent=11 // pred_check
          %p165 = pneg %p61
        $region14: #{tpu_custom_call.1} parent=11 // pred_check_branch
          %167 = sbr.rel (%p165) target = $region16
        $region15: #{tpu_custom_call.1} parent=11 // pred_region
          _
        $region16: #{tpu_custom_call.1} parent=11 // pred_fallthru
          _
        // Predicated region
        $region17: #{tpu_custom_call.1} parent=11 // pred_check
          %p168 = pneg %p82
        $region18: #{tpu_custom_call.1} parent=11 // pred_check_branch
          %170 = sbr.rel (%p168) target = $region20
        $region19: #{tpu_custom_call.1} parent=11 // pred_region
          _
        $region20: #{tpu_custom_call.1} parent=11 // pred_fallthru
          _
        // Predicated region
        $region21: #{tpu_custom_call.1} parent=11 // pred_check
          %p171 = pneg %p103
        $region22: #{tpu_custom_call.1} parent=11 // pred_check_branch
          %173 = sbr.rel (%p171) target = $region24
        $region23: #{tpu_custom_call.1} parent=11 // pred_region
          _
        $region24: #{tpu_custom_call.1} parent=11 // pred_fallthru
          _
        // Predicated region
        $region25: #{tpu_custom_call.1} parent=11 // pred_check
          %p174 = pneg %p124
        $region26: #{tpu_custom_call.1} parent=11 // pred_check_branch
          %176 = sbr.rel (%p174) target = $region28
        $region27: #{tpu_custom_call.1} parent=11 // pred_region
          _
        $region28: #{tpu_custom_call.1} parent=11 // pred_fallthru
          _
      $region12: #{tpu_custom_call.1} parent=5 // pred_fallthru
        _
      %p177 = scmp.lt.s32.totalorder %s14, 2
      // Predicated region
      $region29: #{tpu_custom_call.1} parent=5 // pred_check
        %p178 = pneg %p177
      $region30: #{tpu_custom_call.1} parent=5 // pred_check_branch
        %180 = sbr.rel (%p178) target = $region32
      $region31: #{tpu_custom_call.1} parent=5 // pred_region
        // Predicated region
        $region33: #{tpu_custom_call.1} parent=31 // pred_check
          %p181 = pneg %p34
        $region34: #{tpu_custom_call.1} parent=31 // pred_check_branch
          %183 = sbr.rel (%p181) target = $region36
        $region35: #{tpu_custom_call.1} parent=31 // pred_region
          %s184 = smul.u32 32, %s14
          %p185 = scmp.lt.s32.totalorder %s184, 63
          %s186 = scalar_select %p185, %s184, 63
          %s187 = smul.addr %s186, 4
          %s188 = scalar_lea.vmem %s0, %s187
          %s189 = smul.u32 32, %s14
        $region36: #{tpu_custom_call.1} parent=31 // pred_fallthru
          _
      $region32: #{tpu_custom_call.1} parent=5 // pred_fallthru
        _
      %p190 = scmp.le.s32.totalorder 1, %s14
      %p191 = scmp.lt.s32.totalorder %s14, 3
      %p192 = pnand %p190, %p191
      %p193 = pneg %p192
      // Predicated region
      $region37: #{tpu_custom_call.1} parent=5 // pred_check
        _
      $region38: #{tpu_custom_call.1} parent=5 // pred_check_branch
        %195 = sbr.rel (%p192) target = $region40
      $region39: #{tpu_custom_call.1} parent=5 // pred_region
        %s196 = ssub.s32 %s14, 1
        %s197 = smul.u32 32, %s19
        %p198 = scmp.lt.s32.totalorder %s197, 63
        %s199 = scalar_select %p198, %s197, 63
        %s200 = smul.addr %s199, 4
        %s201 = scalar_lea.vmem %s0, %s200
        %p202 = pneg %p40
        %p203 = pneg %p37
        %p204 = pneg %p61
        %p205 = pneg %p58
        %p206 = pneg %p82
        %p207 = pneg %p79
        %p208 = pneg %p103
        %p209 = pneg %p100
        %p210 = pneg %p124
        %p211 = pneg %p121
        %p212 = pneg %p150
        %p213 = pneg %p147
        %s214 = sand.u32 %s137, 1
        %s215 = scalar_lea.sflag [#allocation3], %s214
        %s216 = sand.u32 %s137, 1
        %s217 = smul.addr %s216, 32
        %s218 = scalar_lea.vmem [#allocation2], %s217
        %s219 = smul.u32 32, %s19
        %p220 = scmp.lt.s32.totalorder %s219, 63
        %s221 = scalar_select %p220, %s219, 63
        %s222 = smul.addr %s221, 4
        %s223 = scalar_lea.vmem %s0, %s222
        %s224 = smul.u32 32, %s19
        %s225 = smul.u32 4, %s19
        %v226 = vld [vmem:[%s223] sm:$0xf]
        %v227 = vld [vmem:[%s223 + $0x4] sm:$0xf]
        %v228 = vld [vmem:[%s223 + $0x8] sm:$0xf]
        %v229 = vld [vmem:[%s223 + $0xc] sm:$0xf]
        %v230 = vld [vmem:[%s223 + $0x10] sm:$0xf]
        %v231 = vld [vmem:[%s223 + $0x14] sm:$0xf]
        %v232 = vld [vmem:[%s223 + $0x18] sm:$0xf]
        %v233 = vld [vmem:[%s223 + $0x1c] sm:$0xf]
        %v234 = vld [vmem:[%s223 + $0x20] sm:$0xf]
        %v235 = vld [vmem:[%s223 + $0x24] sm:$0xf]
        %v236 = vld [vmem:[%s223 + $0x28] sm:$0xf]
        %v237 = vld [vmem:[%s223 + $0x2c] sm:$0xf]
        %v238 = vld [vmem:[%s223 + $0x30] sm:$0xf]
        %v239 = vld [vmem:[%s223 + $0x34] sm:$0xf]
        %v240 = vld [vmem:[%s223 + $0x38] sm:$0xf]
        %v241 = vld [vmem:[%s223 + $0x3c] sm:$0xf]
        %v242 = vld [vmem:[%s223 + $0x40] sm:$0xf]
        %v243 = vld [vmem:[%s223 + $0x44] sm:$0xf]
        %v244 = vld [vmem:[%s223 + $0x48] sm:$0xf]
        %v245 = vld [vmem:[%s223 + $0x4c] sm:$0xf]
        %v246 = vld [vmem:[%s223 + $0x50] sm:$0xf]
        %v247 = vld [vmem:[%s223 + $0x54] sm:$0xf]
        %v248 = vld [vmem:[%s223 + $0x58] sm:$0xf]
        %v249 = vld [vmem:[%s223 + $0x5c] sm:$0xf]
        %v250 = vld [vmem:[%s223 + $0x60] sm:$0xf]
        %v251 = vld [vmem:[%s223 + $0x64] sm:$0xf]
        %v252 = vld [vmem:[%s223 + $0x68] sm:$0xf]
        %v253 = vld [vmem:[%s223 + $0x6c] sm:$0xf]
        %v254 = vld [vmem:[%s223 + $0x70] sm:$0xf]
        %v255 = vld [vmem:[%s223 + $0x74] sm:$0xf]
        %v256 = vld [vmem:[%s223 + $0x78] sm:$0xf]
        %v257 = vld [vmem:[%s223 + $0x7c] sm:$0xf]
        %v258 = vunpack.c.l.bf16 %v226
        %v259 = vunpack.c.l.bf16 %v227
        %v260 = vunpack.c.l.bf16 %v228
        %v261 = vunpack.c.l.bf16 %v229
        %v262 = vunpack.c.l.bf16 %v230
        %v263 = vunpack.c.l.bf16 %v231
        %v264 = vunpack.c.l.bf16 %v232
        %v265 = vunpack.c.l.bf16 %v233
        %v266 = vunpack.c.l.bf16 %v234
        %v267 = vunpack.c.l.bf16 %v235
        %v268 = vunpack.c.l.bf16 %v236
        %v269 = vunpack.c.l.bf16 %v237
        %v270 = vunpack.c.l.bf16 %v238
        %v271 = vunpack.c.l.bf16 %v239
        %v272 = vunpack.c.l.bf16 %v240
        %v273 = vunpack.c.l.bf16 %v241
        %v274 = vunpack.c.l.bf16 %v242
        %v275 = vunpack.c.l.bf16 %v243
        %v276 = vunpack.c.l.bf16 %v244
        %v277 = vunpack.c.l.bf16 %v245
        %v278 = vunpack.c.l.bf16 %v246
        %v279 = vunpack.c.l.bf16 %v247
        %v280 = vunpack.c.l.bf16 %v248
        %v281 = vunpack.c.l.bf16 %v249
        %v282 = vunpack.c.l.bf16 %v250
        %v283 = vunpack.c.l.bf16 %v251
        %v284 = vunpack.c.l.bf16 %v252
        %v285 = vunpack.c.l.bf16 %v253
        %v286 = vunpack.c.l.bf16 %v254
        %v287 = vunpack.c.l.bf16 %v255
        %v288 = vunpack.c.l.bf16 %v256
        %v289 = vunpack.c.l.bf16 %v257
        %vm290 = vcmask 261120
        %v291 = vsel %vm290, %v258, 0.0
        %v292 = vrot.slane %v291, 4
        %v293 = vadd.f32 %v291, %v292
        %v294 = vrot.slane %v293, 2
        %v295 = vadd.f32 %v293, %v294
        %v296 = vrot.slane %v295, 1
        %v297 = vadd.f32 %v295, %v296
        %v298 = vsel %vm290, %v259, 0.0
        %v299 = vrot.slane %v298, 4
        %v300 = vadd.f32 %v298, %v299
        %v301 = vrot.slane %v300, 2
        %v302 = vadd.f32 %v300, %v301
        %v303 = vrot.slane %v302, 1
        %v304 = vadd.f32 %v302, %v303
        %v305 = vsel %vm290, %v260, 0.0
        %v306 = vrot.slane %v305, 4
        %v307 = vadd.f32 %v305, %v306
        %v308 = vrot.slane %v307, 2
        %v309 = vadd.f32 %v307, %v308
        %v310 = vrot.slane %v309, 1
        %v311 = vadd.f32 %v309, %v310
        %v312 = vsel %vm290, %v261, 0.0
        %v313 = vrot.slane %v312, 4
        %v314 = vadd.f32 %v312, %v313
        %v315 = vrot.slane %v314, 2
        %v316 = vadd.f32 %v314, %v315
        %v317 = vrot.slane %v316, 1
        %v318 = vadd.f32 %v316, %v317
        %v319 = vsel %vm290, %v262, 0.0
        %v320 = vrot.slane %v319, 4
        %v321 = vadd.f32 %v319, %v320
        %v322 = vrot.slane %v321, 2
        %v323 = vadd.f32 %v321, %v322
        %v324 = vrot.slane %v323, 1
        %v325 = vadd.f32 %v323, %v324
        %v326 = vsel %vm290, %v263, 0.0
        %v327 = vrot.slane %v326, 4
        %v328 = vadd.f32 %v326, %v327
        %v329 = vrot.slane %v328, 2
        %v330 = vadd.f32 %v328, %v329
        %v331 = vrot.slane %v330, 1
        %v332 = vadd.f32 %v330, %v331
        %v333 = vsel %vm290, %v264, 0.0
        %v334 = vrot.slane %v333, 4
        %v335 = vadd.f32 %v333, %v334
        %v336 = vrot.slane %v335, 2
        %v337 = vadd.f32 %v335, %v336
        %v338 = vrot.slane %v337, 1
        %v339 = vadd.f32 %v337, %v338
        %v340 = vsel %vm290, %v265, 0.0
        %v341 = vrot.slane %v340, 4
        %v342 = vadd.f32 %v340, %v341
        %v343 = vrot.slane %v342, 2
        %v344 = vadd.f32 %v342, %v343
        %v345 = vrot.slane %v344, 1
        %v346 = vadd.f32 %v344, %v345
        %v347 = vsel %vm290, %v266, 0.0
        %v348 = vrot.slane %v347, 4
        %v349 = vadd.f32 %v347, %v348
        %v350 = vrot.slane %v349, 2
        %v351 = vadd.f32 %v349, %v350
        %v352 = vrot.slane %v351, 1
        %v353 = vadd.f32 %v351, %v352
        %v354 = vsel %vm290, %v267, 0.0
        %v355 = vrot.slane %v354, 4
        %v356 = vadd.f32 %v354, %v355
        %v357 = vrot.slane %v356, 2
        %v358 = vadd.f32 %v356, %v357
        %v359 = vrot.slane %v358, 1
        %v360 = vadd.f32 %v358, %v359
        %v361 = vsel %vm290, %v268, 0.0
        %v362 = vrot.slane %v361, 4
        %v363 = vadd.f32 %v361, %v362
        %v364 = vrot.slane %v363, 2
        %v365 = vadd.f32 %v363, %v364
        %v366 = vrot.slane %v365, 1
        %v367 = vadd.f32 %v365, %v366
        %v368 = vsel %vm290, %v269, 0.0
        %v369 = vrot.slane %v368, 4
        %v370 = vadd.f32 %v368, %v369
        %v371 = vrot.slane %v370, 2
        %v372 = vadd.f32 %v370, %v371
        %v373 = vrot.slane %v372, 1
        %v374 = vadd.f32 %v372, %v373
        %v375 = vsel %vm290, %v270, 0.0
        %v376 = vrot.slane %v375, 4
        %v377 = vadd.f32 %v375, %v376
        %v378 = vrot.slane %v377, 2
        %v379 = vadd.f32 %v377, %v378
        %v380 = vrot.slane %v379, 1
        %v381 = vadd.f32 %v379, %v380
        %v382 = vsel %vm290, %v271, 0.0
        %v383 = vrot.slane %v382, 4
        %v384 = vadd.f32 %v382, %v383
        %v385 = vrot.slane %v384, 2
        %v386 = vadd.f32 %v384, %v385
        %v387 = vrot.slane %v386, 1
        %v388 = vadd.f32 %v386, %v387
        %v389 = vsel %vm290, %v272, 0.0
        %v390 = vrot.slane %v389, 4
        %v391 = vadd.f32 %v389, %v390
        %v392 = vrot.slane %v391, 2
        %v393 = vadd.f32 %v391, %v392
        %v394 = vrot.slane %v393, 1
        %v395 = vadd.f32 %v393, %v394
        %v396 = vsel %vm290, %v273, 0.0
        %v397 = vrot.slane %v396, 4
        %v398 = vadd.f32 %v396, %v397
        %v399 = vrot.slane %v398, 2
        %v400 = vadd.f32 %v398, %v399
        %v401 = vrot.slane %v400, 1
        %v402 = vadd.f32 %v400, %v401
        %v403 = vsel %vm290, %v274, 0.0
        %v404 = vrot.slane %v403, 4
        %v405 = vadd.f32 %v403, %v404
        %v406 = vrot.slane %v405, 2
        %v407 = vadd.f32 %v405, %v406
        %v408 = vrot.slane %v407, 1
        %v409 = vadd.f32 %v407, %v408
        %v410 = vsel %vm290, %v275, 0.0
        %v411 = vrot.slane %v410, 4
        %v412 = vadd.f32 %v410, %v411
        %v413 = vrot.slane %v412, 2
        %v414 = vadd.f32 %v412, %v413
        %v415 = vrot.slane %v414, 1
        %v416 = vadd.f32 %v414, %v415
        %v417 = vsel %vm290, %v276, 0.0
        %v418 = vrot.slane %v417, 4
        %v419 = vadd.f32 %v417, %v418
        %v420 = vrot.slane %v419, 2
        %v421 = vadd.f32 %v419, %v420
        %v422 = vrot.slane %v421, 1
        %v423 = vadd.f32 %v421, %v422
        %v424 = vsel %vm290, %v277, 0.0
        %v425 = vrot.slane %v424, 4
        %v426 = vadd.f32 %v424, %v425
        %v427 = vrot.slane %v426, 2
        %v428 = vadd.f32 %v426, %v427
        %v429 = vrot.slane %v428, 1
        %v430 = vadd.f32 %v428, %v429
        %v431 = vsel %vm290, %v278, 0.0
        %v432 = vrot.slane %v431, 4
        %v433 = vadd.f32 %v431, %v432
        %v434 = vrot.slane %v433, 2
        %v435 = vadd.f32 %v433, %v434
        %v436 = vrot.slane %v435, 1
        %v437 = vadd.f32 %v435, %v436
        %v438 = vsel %vm290, %v279, 0.0
        %v439 = vrot.slane %v438, 4
        %v440 = vadd.f32 %v438, %v439
        %v441 = vrot.slane %v440, 2
        %v442 = vadd.f32 %v440, %v441
        %v443 = vrot.slane %v442, 1
        %v444 = vadd.f32 %v442, %v443
        %v445 = vsel %vm290, %v280, 0.0
        %v446 = vrot.slane %v445, 4
        %v447 = vadd.f32 %v445, %v446
        %v448 = vrot.slane %v447, 2
        %v449 = vadd.f32 %v447, %v448
        %v450 = vrot.slane %v449, 1
        %v451 = vadd.f32 %v449, %v450
        %v452 = vsel %vm290, %v281, 0.0
        %v453 = vrot.slane %v452, 4
        %v454 = vadd.f32 %v452, %v453
        %v455 = vrot.slane %v454, 2
        %v456 = vadd.f32 %v454, %v455
        %v457 = vrot.slane %v456, 1
        %v458 = vadd.f32 %v456, %v457
        %v459 = vsel %vm290, %v282, 0.0
        %v460 = vrot.slane %v459, 4
        %v461 = vadd.f32 %v459, %v460
        %v462 = vrot.slane %v461, 2
        %v463 = vadd.f32 %v461, %v462
        %v464 = vrot.slane %v463, 1
        %v465 = vadd.f32 %v463, %v464
        %v466 = vsel %vm290, %v283, 0.0
        %v467 = vrot.slane %v466, 4
        %v468 = vadd.f32 %v466, %v467
        %v469 = vrot.slane %v468, 2
        %v470 = vadd.f32 %v468, %v469
        %v471 = vrot.slane %v470, 1
        %v472 = vadd.f32 %v470, %v471
        %v473 = vsel %vm290, %v284, 0.0
        %v474 = vrot.slane %v473, 4
        %v475 = vadd.f32 %v473, %v474
        %v476 = vrot.slane %v475, 2
        %v477 = vadd.f32 %v475, %v476
        %v478 = vrot.slane %v477, 1
        %v479 = vadd.f32 %v477, %v478
        %v480 = vsel %vm290, %v285, 0.0
        %v481 = vrot.slane %v480, 4
        %v482 = vadd.f32 %v480, %v481
        %v483 = vrot.slane %v482, 2
        %v484 = vadd.f32 %v482, %v483
        %v485 = vrot.slane %v484, 1
        %v486 = vadd.f32 %v484, %v485
        %v487 = vsel %vm290, %v286, 0.0
        %v488 = vrot.slane %v487, 4
        %v489 = vadd.f32 %v487, %v488
        %v490 = vrot.slane %v489, 2
        %v491 = vadd.f32 %v489, %v490
        %v492 = vrot.slane %v491, 1
        %v493 = vadd.f32 %v491, %v492
        %v494 = vsel %vm290, %v287, 0.0
        %v495 = vrot.slane %v494, 4
        %v496 = vadd.f32 %v494, %v495
        %v497 = vrot.slane %v496, 2
        %v498 = vadd.f32 %v496, %v497
        %v499 = vrot.slane %v498, 1
        %v500 = vadd.f32 %v498, %v499
        %v501 = vsel %vm290, %v288, 0.0
        %v502 = vrot.slane %v501, 4
        %v503 = vadd.f32 %v501, %v502
        %v504 = vrot.slane %v503, 2
        %v505 = vadd.f32 %v503, %v504
        %v506 = vrot.slane %v505, 1
        %v507 = vadd.f32 %v505, %v506
        %v508 = vsel %vm290, %v289, 0.0
        %v509 = vrot.slane %v508, 4
        %v510 = vadd.f32 %v508, %v509
        %v511 = vrot.slane %v510, 2
        %v512 = vadd.f32 %v510, %v511
        %v513 = vrot.slane %v512, 1
        %v514 = vadd.f32 %v512, %v513
        %v515 = vrcp.pop 8.0
        %v516 = vmul.f32 %v297, %v515
        %v517 = vmul.f32 %v304, %v515
        %v518 = vmul.f32 %v311, %v515
        %v519 = vmul.f32 %v318, %v515
        %v520 = vmul.f32 %v325, %v515
        %v521 = vmul.f32 %v332, %v515
        %v522 = vmul.f32 %v339, %v515
        %v523 = vmul.f32 %v346, %v515
        %v524 = vmul.f32 %v353, %v515
        %v525 = vmul.f32 %v360, %v515
        %v526 = vmul.f32 %v367, %v515
        %v527 = vmul.f32 %v374, %v515
        %v528 = vmul.f32 %v381, %v515
        %v529 = vmul.f32 %v388, %v515
        %v530 = vmul.f32 %v395, %v515
        %v531 = vmul.f32 %v402, %v515
        %v532 = vmul.f32 %v409, %v515
        %v533 = vmul.f32 %v416, %v515
        %v534 = vmul.f32 %v423, %v515
        %v535 = vmul.f32 %v430, %v515
        %v536 = vmul.f32 %v437, %v515
        %v537 = vmul.f32 %v444, %v515
        %v538 = vmul.f32 %v451, %v515
        %v539 = vmul.f32 %v458, %v515
        %v540 = vmul.f32 %v465, %v515
        %v541 = vmul.f32 %v472, %v515
        %v542 = vmul.f32 %v479, %v515
        %v543 = vmul.f32 %v486, %v515
        %v544 = vmul.f32 %v493, %v515
        %v545 = vmul.f32 %v500, %v515
        %v546 = vmul.f32 %v507, %v515
        %v547 = vmul.f32 %v514, %v515
        %v548 = vld [vmem:[%s1] sm:$0xff]
        %v549 = vld [vmem:[%s1 + $0x8] sm:$0xff]
        %v550 = vld [vmem:[%s1 + $0x10] sm:$0xff]
        %v551 = vld [vmem:[%s1 + $0x18] sm:$0xff]
        %v552 = vld [vmem:[%s2] sm:$0x1]
        %v554 = vlaneseq
        %v555 = vshrl.u32 %v554, 7
        %v556 = vsub.s32 0, %v555
        %v557 = vrot.slane %v552, %v556
        %vm591 = vcmask 1041409
        %v592 = vsel %vm591, %v517, %v516
        %vm593 = vcmask 1042434
        %v594 = vsel %vm593, %v518, %v592
        %vm595 = vcmask 1043459
        %v596 = vsel %vm595, %v519, %v594
        %vm597 = vcmask 1044484
        %v598 = vsel %vm597, %v520, %v596
        %vm599 = vcmask 1045509
        %v600 = vsel %vm599, %v521, %v598
        %vm601 = vcmask 1046534
        %v602 = vsel %vm601, %v522, %v600
        %vm603 = vcmask 1047559
        %v604 = vsel %vm603, %v523, %v602
        %v605 = vsel %vm591, %v525, %v524
        %v606 = vsel %vm593, %v526, %v605
        %v607 = vsel %vm595, %v527, %v606
        %v608 = vsel %vm597, %v528, %v607
        %v609 = vsel %vm599, %v529, %v608
        %v610 = vsel %vm601, %v530, %v609
        %v611 = vsel %vm603, %v531, %v610
        %v612 = vsel %vm591, %v533, %v532
        %v613 = vsel %vm593, %v534, %v612
        %v614 = vsel %vm595, %v535, %v613
        %v615 = vsel %vm597, %v536, %v614
        %v616 = vsel %vm599, %v537, %v615
        %v617 = vsel %vm601, %v538, %v616
        %v618 = vsel %vm603, %v539, %v617
        %v619 = vsel %vm591, %v541, %v540
        %v620 = vsel %vm593, %v542, %v619
        %v621 = vsel %vm595, %v543, %v620
        %v622 = vsel %vm597, %v544, %v621
        %v623 = vsel %vm599, %v545, %v622
        %v624 = vsel %vm601, %v546, %v623
        %v625 = vsel %vm603, %v547, %v624
        %v626 = vsel %vm290, %v604, 0
        %v628 = vsel %vm290, %v611, 0
        %v630 = vsel %vm290, %v618, 0
        %v632 = vsel %vm290, %v625, 0
        %634 = vmatprep.subr.mxu0 0.0
        %635 = vmatpush1.msra.mxu0 %v548
        %636 = vmatprep.subr.mxu0 0.0
        %637 = vmatpush1.msra.mxu0 %v549
        %638 = vmatprep.subr.mxu0 0.0
        %639 = vmatpush1.msra.mxu0 %v550
        %640 = vmatprep.subr.mxu0 0.0
        %641 = vmatpush1.msra.mxu0 %v551
        %642 = vmatprep.subr.mxu0 0.0
        %643 = vmatpush1.msra.mxu0 0.0
        %644 = vmatprep.subr.mxu0 0.0
        %645 = vmatpush1.msra.mxu0 0.0
        %646 = vmatprep.subr.mxu0 0.0
        %647 = vmatpush1.msra.mxu0 0.0
        %648 = vmatprep.subr.mxu0 0.0
        %649 = vmatpush1.msra.mxu0 0.0
        %650 = vmatprep.subr.mxu0 0.0
        %651 = vmatpush1.msra.mxu0 0.0
        %652 = vmatprep.subr.mxu0 0.0
        %653 = vmatpush1.msra.mxu0 0.0
        %654 = vmatprep.subr.mxu0 0.0
        %655 = vmatpush1.msra.mxu0 0.0
        %656 = vmatprep.subr.mxu0 0.0
        %657 = vmatpush1.msra.mxu0 0.0
        %658 = vmatprep.subr.mxu0 0.0
        %659 = vmatpush1.msra.mxu0 0.0
        %660 = vmatprep.subr.mxu0 0.0
        %661 = vmatpush1.msra.mxu0 0.0
        %662 = vmatprep.subr.mxu0 0.0
        %663 = vmatpush1.msra.mxu0 0.0
        %664 = vmatprep.subr.mxu0 0.0
        %665 = vmatpush1.msra.mxu0 0.0
        %666 = vmatprep.subr.mxu0 0.0
        %667 = vmatpush1.msra.mxu0 0.0
        %668 = vmatprep.subr.mxu0 0.0
        %669 = vmatpush1.msra.mxu0 0.0
        %670 = vmatprep.subr.mxu0 0.0
        %671 = vmatpush1.msra.mxu0 0.0
        %672 = vmatprep.subr.mxu0 0.0
        %673 = vmatpush1.msra.mxu0 0.0
        %674 = vmatprep.subr.mxu0 0.0
        %675 = vmatpush1.msra.mxu0 0.0
        %676 = vmatprep.subr.mxu0 0.0
        %677 = vmatpush1.msra.mxu0 0.0
        %678 = vmatprep.subr.mxu0 0.0
        %679 = vmatpush1.msra.mxu0 0.0
        %680 = vmatprep.subr.mxu0 0.0
        %681 = vmatpush1.msra.mxu0 0.0
        %682 = vmatprep.subr.mxu0 0.0
        %683 = vmatpush1.msra.mxu0 0.0
        %684 = vmatprep.subr.mxu0 0.0
        %685 = vmatpush1.msra.mxu0 0.0
        %686 = vmatprep.subr.mxu0 0.0
        %687 = vmatpush1.msra.mxu0 0.0
        %688 = vmatprep.subr.mxu0 0.0
        %689 = vmatpush1.msra.mxu0 0.0
        %690 = vmatprep.subr.mxu0 0.0
        %691 = vmatpush1.msra.mxu0 0.0
        %692 = vmatprep.subr.mxu0 0.0
        %693 = vmatpush1.msra.mxu0 0.0
        %694 = vmatprep.subr.mxu0 0.0
        %695 = vmatpush1.msra.mxu0 0.0
        %696 = vmatprep.subr.mxu0 0.0
        %697 = vmatpush1.msra.mxu0 0.0
        %698 = vmatprep.mubr.f32.mxu0 0.0
        %699 = vmatmul.mubr.f32.gmra.mrb[0].mxu0 %v626
        %v700 = vpop.f32.mrb[0].mxu0
        %v701 = vadd.f32 %v557, %v700
        %v702 = vpop.f32.mrb[0].mxu0
        %703 = vmatprep.mubr.f32.mxu0 0.0
        %704 = vmatmul.mubr.f32.gmra.mrb[0].mxu0 %v628
        %v705 = vpop.f32.mrb[0].mxu0
        %v706 = vadd.f32 %v557, %v705
        %v707 = vpop.f32.mrb[0].mxu0
        %708 = vmatprep.mubr.f32.mxu0 0.0
        %709 = vmatmul.mubr.f32.gmra.mrb[0].mxu0 %v630
        %v710 = vpop.f32.mrb[0].mxu0
        %v711 = vadd.f32 %v557, %v710
        %v712 = vpop.f32.mrb[0].mxu0
        %713 = vmatprep.mubr.f32.mxu0 0.0
        %714 = vmatmul.mubr.f32.gmra.mrb[0].mxu0 %v632
        %v715 = vpop.f32.mrb[0].mxu0
        %v716 = vadd.f32 %v557, %v715
        %v717 = vpop.f32.mrb[0].mxu0
        %718 = vdwg.mxu0
        %v719 = vtanh.pop %v701
        %v720 = vtanh.pop %v706
        %v721 = vtanh.pop %v711
        %v722 = vtanh.pop %v716
        %v723 = vld [vmem:[%s3] sm:$0xff]
        %v724 = vld [vmem:[%s3 + $0x8] sm:$0xff]
        %v725 = vld [vmem:[%s3 + $0x10] sm:$0xff]
        %v726 = vld [vmem:[%s3 + $0x18] sm:$0xff]
        %v727 = vld [vmem:[%s4] sm:$0x1]
        %v729 = vlaneseq
        %v730 = vshrl.u32 %v729, 7
        %v731 = vsub.s32 0, %v730
        %v732 = vrot.slane %v727, %v731
        %v735 = vsel %vm290, %v719, 0
        %v738 = vsel %vm290, %v720, 0
        %v741 = vsel %vm290, %v721, 0
        %v744 = vsel %vm290, %v722, 0
        %746 = vmatprep.subr.mxu0 0.0
        %747 = vmatpush1.msra.mxu0 %v723
        %748 = vmatprep.subr.mxu0 0.0
        %749 = vmatpush1.msra.mxu0 %v724
        %750 = vmatprep.subr.mxu0 0.0
        %751 = vmatpush1.msra.mxu0 %v725
        %752 = vmatprep.subr.mxu0 0.0
        %753 = vmatpush1.msra.mxu0 %v726
        %754 = vmatprep.subr.mxu0 0.0
        %755 = vmatpush1.msra.mxu0 0.0
        %756 = vmatprep.subr.mxu0 0.0
        %757 = vmatpush1.msra.mxu0 0.0
        %758 = vmatprep.subr.mxu0 0.0
        %759 = vmatpush1.msra.mxu0 0.0
        %760 = vmatprep.subr.mxu0 0.0
        %761 = vmatpush1.msra.mxu0 0.0
        %762 = vmatprep.subr.mxu0 0.0
        %763 = vmatpush1.msra.mxu0 0.0
        %764 = vmatprep.subr.mxu0 0.0
        %765 = vmatpush1.msra.mxu0 0.0
        %766 = vmatprep.subr.mxu0 0.0
        %767 = vmatpush1.msra.mxu0 0.0
        %768 = vmatprep.subr.mxu0 0.0
        %769 = vmatpush1.msra.mxu0 0.0
        %770 = vmatprep.subr.mxu0 0.0
        %771 = vmatpush1.msra.mxu0 0.0
        %772 = vmatprep.subr.mxu0 0.0
        %773 = vmatpush1.msra.mxu0 0.0
        %774 = vmatprep.subr.mxu0 0.0
        %775 = vmatpush1.msra.mxu0 0.0
        %776 = vmatprep.subr.mxu0 0.0
        %777 = vmatpush1.msra.mxu0 0.0
        %778 = vmatprep.subr.mxu0 0.0
        %779 = vmatpush1.msra.mxu0 0.0
        %780 = vmatprep.subr.mxu0 0.0
        %781 = vmatpush1.msra.mxu0 0.0
        %782 = vmatprep.subr.mxu0 0.0
        %783 = vmatpush1.msra.mxu0 0.0
        %784 = vmatprep.subr.mxu0 0.0
        %785 = vmatpush1.msra.mxu0 0.0
        %786 = vmatprep.subr.mxu0 0.0
        %787 = vmatpush1.msra.mxu0 0.0
        %788 = vmatprep.subr.mxu0 0.0
        %789 = vmatpush1.msra.mxu0 0.0
        %790 = vmatprep.subr.mxu0 0.0
        %791 = vmatpush1.msra.mxu0 0.0
        %792 = vmatprep.subr.mxu0 0.0
        %793 = vmatpush1.msra.mxu0 0.0
        %794 = vmatprep.subr.mxu0 0.0
        %795 = vmatpush1.msra.mxu0 0.0
        %796 = vmatprep.subr.mxu0 0.0
        %797 = vmatpush1.msra.mxu0 0.0
        %798 = vmatprep.subr.mxu0 0.0
        %799 = vmatpush1.msra.mxu0 0.0
        %800 = vmatprep.subr.mxu0 0.0
        %801 = vmatpush1.msra.mxu0 0.0
        %802 = vmatprep.subr.mxu0 0.0
        %803 = vmatpush1.msra.mxu0 0.0
        %804 = vmatprep.subr.mxu0 0.0
        %805 = vmatpush1.msra.mxu0 0.0
        %806 = vmatprep.subr.mxu0 0.0
        %807 = vmatpush1.msra.mxu0 0.0
        %808 = vmatprep.subr.mxu0 0.0
        %809 = vmatpush1.msra.mxu0 0.0
        %810 = vmatprep.mubr.f32.mxu0 0.0
        %811 = vmatmul.mubr.f32.gmra.mrb[0].mxu0 %v735
        %v812 = vpop.f32.mrb[0].mxu0
        %v813 = vadd.f32 %v732, %v812
        %v814 = vpop.f32.mrb[0].mxu0
        %815 = vmatprep.mubr.f32.mxu0 0.0
        %816 = vmatmul.mubr.f32.gmra.mrb[0].mxu0 %v738
        %v817 = vpop.f32.mrb[0].mxu0
        %v818 = vadd.f32 %v732, %v817
        %v819 = vpop.f32.mrb[0].mxu0
        %820 = vmatprep.mubr.f32.mxu0 0.0
        %821 = vmatmul.mubr.f32.gmra.mrb[0].mxu0 %v741
        %v822 = vpop.f32.mrb[0].mxu0
        %v823 = vadd.f32 %v732, %v822
        %v824 = vpop.f32.mrb[0].mxu0
        %825 = vmatprep.mubr.f32.mxu0 0.0
        %826 = vmatmul.mubr.f32.gmra.mrb[0].mxu0 %v744
        %v827 = vpop.f32.mrb[0].mxu0
        %v828 = vadd.f32 %v732, %v827
        %v829 = vpop.f32.mrb[0].mxu0
        %830 = vdwg.mxu0
        %831 = vmax.xlane.f32.xlu0 %v813
        %v832 = vpop.xlane.xlu0 %831
        %833 = vmax.xlane.f32.xlu0 %v818
        %v834 = vpop.xlane.xlu0 %833
        %835 = vmax.xlane.f32.xlu0 %v823
        %v836 = vpop.xlane.xlu0 %835
        %837 = vmax.xlane.f32.xlu0 %v828
        %v838 = vpop.xlane.xlu0 %837
        %v839 = vsub.f32 %v813, %v832
        %v840 = vsub.f32 %v818, %v834
        %v841 = vsub.f32 %v823, %v836
        %v842 = vsub.f32 %v828, %v838
        %v843 = vmul.f32 %v839, 1.442695
        %v844 = vpow.pop %v843
        %v845 = vmul.f32 %v840, 1.442695
        %v846 = vpow.pop %v845
        %v847 = vmul.f32 %v841, 1.442695
        %v848 = vpow.pop %v847
        %v849 = vmul.f32 %v842, 1.442695
        %v850 = vpow.pop %v849
        %851 = vadd.xlane.f32.xlu0 %v844
        %v852 = vpop.xlane.xlu0 %851
        %853 = vadd.xlane.f32.xlu0 %v846
        %v854 = vpop.xlane.xlu0 %853
        %855 = vadd.xlane.f32.xlu0 %v848
        %v856 = vpop.xlane.xlu0 %855
        %857 = vadd.xlane.f32.xlu0 %v850
        %v858 = vpop.xlane.xlu0 %857
        %v859 = vrcp.pop %v852
        %v860 = vrcp.pop %v854
        %v861 = vrcp.pop %v856
        %v862 = vrcp.pop %v858
        %v863 = vmul.f32 %v844, %v859
        %v864 = vmul.f32 %v846, %v860
        %v865 = vmul.f32 %v848, %v861
        %v866 = vmul.f32 %v850, %v862
        %867 = vst [vmem:[%s218] sm:$0xff] %v863
        %868 = vst [vmem:[%s218 + $0x8] sm:$0xff] %v864
        %869 = vst [vmem:[%s218 + $0x10] sm:$0xff] %v865
        %870 = vst [vmem:[%s218 + $0x18] sm:$0xff] %v866
        %s871 = sand.u32 %s137, 1
        %s872 = scalar_lea.sflag [#allocation3], %s871
        %s873 = sand.u32 %s137, 1
        %s874 = smul.addr %s873, 32
        %s875 = scalar_lea.vmem [#allocation2], %s874
        // Predicated region
        $region41: #{tpu_custom_call.1} parent=39 // pred_check
          %p876 = pneg %p147
        $region42: #{tpu_custom_call.1} parent=39 // pred_check_branch
          %878 = sbr.rel (%p876) target = $region44
        $region43: #{tpu_custom_call.1} parent=39 // pred_region
          %s879 = smul.u32 4, %s19
          %s881 = ssub.s32 512, 512
          %882 = vsyncadd %s872, %s881
          %s883 = smul.addr %s879, 128
          %s884 = scalar_lea.hbm %s5, %s883
          %s885 = sshll.u32 %s875, 4
          %s886 = int_to_ptr.vmem [resolvable:$true] %s885
          %891 = dma.vmem_to_hbm [thread:$0]  %s886, 512, %s884, %s872, 128, 128, 8
        $region44: #{tpu_custom_call.1} parent=39 // pred_fallthru
          _
      $region40: #{tpu_custom_call.1} parent=5 // pred_fallthru
        _
      %p892 = scmp.le.s32.totalorder 2, %s14
      // Predicated region
      $region45: #{tpu_custom_call.1} parent=5 // pred_check
        %p893 = pneg %p892
      $region46: #{tpu_custom_call.1} parent=5 // pred_check_branch
        %895 = sbr.rel (%p893) target = $region48
      $region47: #{tpu_custom_call.1} parent=5 // pred_region
        %s896 = ssub.s32 %s14, 2
        // Predicated region
        $region49: #{tpu_custom_call.1} parent=47 // pred_check
          %p897 = pneg %p153
        $region50: #{tpu_custom_call.1} parent=47 // pred_check_branch
          %899 = sbr.rel (%p897) target = $region52
        $region51: #{tpu_custom_call.1} parent=47 // pred_region
          %s900 = sand.u32 %s138, 1
          %s901 = scalar_lea.sflag [#allocation3], %s900
          %s902 = sand.u32 %s138, 1
          %s903 = smul.addr %s902, 32
          %s904 = scalar_lea.vmem [#allocation2], %s903
          %905 = dma.done %s901, 512
        $region52: #{tpu_custom_call.1} parent=47 // pred_fallthru
          _
      $region48: #{tpu_custom_call.1} parent=5 // pred_fallthru
        _
    $region6: #{tpu_custom_call.1} parent=1 // loop_footer
      %s18 = sadd.s32 1, %s14
    $region7: #{tpu_custom_call.1} parent=1 // loop_footer_branch
      %13 = sbr.rel target = $region3
    $region8: #{tpu_custom_call.1} parent=1 // loop_exit
      _
    %906 = vsyncpa [#allocation3], 1
    %s907 = scalar_lea.sflag [#allocation3], 1
    %908 = vsyncpa %s907, 1

</llo_original>
